<compile_context>
chip_gen: v7x
topology: tpu7x:2x2x1
jax: 0.10.0
libtpu: 0.0.40
codegen_flags: <defaults>
</compile_context>

<pallas_src>
import jax
import jax.numpy as jnp
from jax.experimental import pallas as pl
from jax.experimental.pallas import tpu as pltpu


def attr_net_kernel(x_ref, w1_ref, b1_ref, w2_ref, b2_ref, o_ref):
    w1 = w1_ref[...]
    w2 = w2_ref[...]
    x = x_ref[...].astype(w1.dtype)
    # Layer 1: Linear(40->128) + (Dropout == identity in eval) + ReLU
    h = jnp.dot(x, w1, preferred_element_type=jnp.float32)
    h = jnp.maximum(h + b1_ref[...].astype(jnp.float32), 0.0)
    # Layer 2: Linear(128->512) + (Dropout == identity) + ReLU
    y = jnp.dot(h.astype(w2.dtype), w2, preferred_element_type=jnp.float32)
    y = jnp.maximum(y + b2_ref[...].astype(jnp.float32), 0.0)
    o_ref[...] = y.astype(o_ref.dtype)


def _tensorcores_per_chip():
    """2 TCs on v7x, 1 on v5e/v6e. Conservative fallback = 1."""
    try:
        kind = jax.devices()[0].device_kind.lower()
    except Exception:
        return 1
    return 2 if ("v7" in kind or "7x" in kind) else 1


def attr_net_forward(x, w1, b1, w2, b2, *, tm=1024, compute_dtype=None):
    """x: (B, 40) float32 -> (B, 512) float32 (eval-mode Attr_Net forward)."""
    B, F_in = x.shape
    H = w1.shape[1]
    F_out = w2.shape[1]

    if compute_dtype is not None:
        # Cast MXU operands once in the wrapper; accumulation stays f32 in-kernel.
        w1 = w1.astype(compute_dtype)
        w2 = w2.astype(compute_dtype)

    # --- batch tile selection: no padding, no output slicing ---
    if B <= tm:
        tm_eff = B                        # single full-extent tile (legal for any B)
    else:
        tm_eff = max(8, (tm // 8) * 8)    # multiple-of-8 tile; last tile may be partial
    # v7x only: keep >= 2 grid steps so the "parallel" batch axis can shard across
    # both TensorCores.  On single-TC v5e/v6e, splitting is pure per-step overhead.
    if (B <= tm and _tensorcores_per_chip() >= 2
            and tm_eff >= 16 and tm_eff % 16 == 0):
        tm_eff //= 2
    grid = (pl.cdiv(B, tm_eff),)

    cost = pl.CostEstimate(
        flops=2 * B * (F_in * H + H * F_out),
        transcendentals=0,
        bytes_accessed=(x.size * x.dtype.itemsize
                        + w1.size * w1.dtype.itemsize
                        + b1.size * b1.dtype.itemsize
                        + w2.size * w2.dtype.itemsize
                        + b2.size * b2.dtype.itemsize
                        + B * F_out * x.dtype.itemsize),
    )

    return pl.pallas_call(
        attr_net_kernel,
        out_shape=jax.ShapeDtypeStruct((B, F_out), x.dtype),
        grid_spec=pl.GridSpec(
            grid=grid,
            in_specs=[
                # x: tile over batch; real (un-padded) 40-wide feature extent.
                pl.BlockSpec((tm_eff, F_in), lambda i: (i, 0)),
                # weights / biases: full arrays, constant block index -> stay resident.
                pl.BlockSpec((F_in, H), lambda i: (0, 0)),
                pl.BlockSpec((1, H), lambda i: (0, 0)),
                pl.BlockSpec((H, F_out), lambda i: (0, 0)),
                pl.BlockSpec((1, F_out), lambda i: (0, 0)),
            ],
            out_specs=pl.BlockSpec((tm_eff, F_out), lambda i: (i, 0)),
        ),
        compiler_params=pltpu.CompilerParams(
            dimension_semantics=("parallel",)),
        cost_estimate=cost,
    )(x, w1, b1, w2, b2)


def init_params(key, attr_filters=(40, 128, 512)):
    """Deterministic init mimicking nn.Linear's U(-1/sqrt(fan_in), 1/sqrt(fan_in))."""
    params = []
    for ii in range(len(attr_filters) - 1):
        fan_in, fan_out = attr_filters[ii], attr_filters[ii + 1]
        key, kw, kb = jax.random.split(key, 3)
        bound = 1.0 / jnp.sqrt(fan_in)
        w = jax.random.uniform(kw, (fan_in, fan_out), jnp.float32, -bound, bound)
        b = jax.random.uniform(kb, (1, fan_out), jnp.float32, -bound, bound)
        params.append((w, b))
    return params


def reference_forward(x, params):
    h = x
    for (w, b) in params:
        h = jnp.maximum(h @ w + b, 0.0)
    return h


if __name__ == "__main__":
    key = jax.random.PRNGKey(0)
    attr_filters = (40, 128, 512)
    (w1, b1), (w2, b2) = init_params(key, attr_filters)
    params = [(w1, b1), (w2, b2)]

    # 1) Small batch, multiple of 8 (single full-extent tile).
    key, kx = jax.random.split(key)
    x = jax.random.normal(kx, (8, attr_filters[0]), jnp.float32)
    out = jax.block_until_ready(attr_net_forward(x, w1, b1, w2, b2))
    assert out.shape == (8, attr_filters[-1])
    assert jnp.allclose(out, reference_forward(x, params), atol=1e-5, rtol=1e-5)

    # 2) Batch NOT a multiple of 8 (single full-extent tile, no padding / slicing).
    key, kx = jax.random.split(key)
    x2 = jax.random.normal(kx, (20, attr_filters[0]), jnp.float32)
    out2 = jax.block_until_ready(attr_net_forward(x2, w1, b1, w2, b2))
    assert out2.shape == (20, attr_filters[-1])
    assert jnp.allclose(out2, reference_forward(x2, params), atol=1e-5, rtol=1e-5)

    # 3) Multi-tile grid with a partial last tile (300 = 2*128 + 44), no padding.
    key, kx = jax.random.split(key)
    x3 = jax.random.normal(kx, (300, attr_filters[0]), jnp.float32)
    out3 = jax.block_until_ready(attr_net_forward(x3, w1, b1, w2, b2, tm=128))
    assert out3.shape == (300, attr_filters[-1])
    assert jnp.allclose(out3, reference_forward(x3, params), atol=1e-5, rtol=1e-5)

    # 4) Optional bf16-operand path (f32 accumulation & output): loose tolerance.
    key, kx = jax.random.split(key)
    x4 = jax.random.normal(kx, (64, attr_filters[0]), jnp.float32)
    out4 = jax.block_until_ready(
        attr_net_forward(x4, w1, b1, w2, b2, compute_dtype=jnp.bfloat16))
    assert out4.shape == (64, attr_filters[-1])
    assert jnp.allclose(out4, reference_forward(x4, params), atol=5e-2, rtol=5e-2)

    print("KERNEL_OK")
</pallas_src>

<mosaic_0001>
module attributes {stable_mosaic.version = 11 : i64} {
  func.func @attr_net_kernel(%arg0: i32, %arg1: memref<8x40xf32, #tpu.memory_space<vmem>>, %arg2: memref<40x128xf32, #tpu.memory_space<vmem>>, %arg3: memref<1x128xf32, #tpu.memory_space<vmem>>, %arg4: memref<128x512xf32, #tpu.memory_space<vmem>>, %arg5: memref<1x512xf32, #tpu.memory_space<vmem>>, %arg6: memref<8x512xf32, #tpu.memory_space<vmem>>) attributes {dimension_semantics = [#tpu.dimension_semantics<parallel>], iteration_bounds = array<i64: 1>, scalar_prefetch = 0 : i64, scratch_operands = 0 : i64, tpu.core_type = #tpu.core_type<tc>, window_params = [{transform_indices = @transform_0, window_bounds = array<i64: 8, 40>}, {pipeline_mode = #tpu.pipeline_mode<synchronous>, transform_indices = @transform_1, window_bounds = array<i64: 40, 128>}, {pipeline_mode = #tpu.pipeline_mode<synchronous>, transform_indices = @transform_2, window_bounds = array<i64: 1, 128>}, {pipeline_mode = #tpu.pipeline_mode<synchronous>, transform_indices = @transform_3, window_bounds = array<i64: 128, 512>}, {pipeline_mode = #tpu.pipeline_mode<synchronous>, transform_indices = @transform_4, window_bounds = array<i64: 1, 512>}, {transform_indices = @transform_5, window_bounds = array<i64: 8, 512>}]} {
    %c0 = arith.constant 0 : index
    %c0_0 = arith.constant 0 : index
    %0 = vector.load %arg2[%c0, %c0_0] : memref<40x128xf32, #tpu.memory_space<vmem>>, vector<40x128xf32>
    %c0_1 = arith.constant 0 : index
    %c0_2 = arith.constant 0 : index
    %1 = vector.load %arg4[%c0_1, %c0_2] : memref<128x512xf32, #tpu.memory_space<vmem>>, vector<128x512xf32>
    %c0_3 = arith.constant 0 : index
    %c0_4 = arith.constant 0 : index
    %2 = vector.load %arg1[%c0_3, %c0_4] : memref<8x40xf32, #tpu.memory_space<vmem>>, vector<8x40xf32>
    %cst = arith.constant dense<0.000000e+00> : vector<8x128xf32>
    %3 = tpu.matmul %2, %0, %cst {dimension_numbers = #tpu.dot_dimension_numbers<[1], [0], [0], [1], [0, 0, 1, 1], [], []>} : vector<8x40xf32>, vector<40x128xf32>, vector<8x128xf32> -> vector<8x128xf32>
    %c0_5 = arith.constant 0 : index
    %c0_6 = arith.constant 0 : index
    %4 = vector.load %arg3[%c0_5, %c0_6] : memref<1x128xf32, #tpu.memory_space<vmem>>, vector<1x128xf32>
    %5 = vector.broadcast %4 : vector<1x128xf32> to vector<8x128xf32>
    %6 = arith.addf %3, %5 : vector<8x128xf32>
    %cst_7 = arith.constant 0.000000e+00 : f32
    %7 = vector.broadcast %cst_7 : f32 to vector<8x128xf32>
    %8 = arith.maximumf %6, %7 : vector<8x128xf32>
    %cst_8 = arith.constant dense<0.000000e+00> : vector<8x512xf32>
    %9 = tpu.matmul %8, %1, %cst_8 {dimension_numbers = #tpu.dot_dimension_numbers<[1], [0], [0], [1], [0, 0, 1, 1], [], []>} : vector<8x128xf32>, vector<128x512xf32>, vector<8x512xf32> -> vector<8x512xf32>
    %c0_9 = arith.constant 0 : index
    %c0_10 = arith.constant 0 : index
    %10 = vector.load %arg5[%c0_9, %c0_10] : memref<1x512xf32, #tpu.memory_space<vmem>>, vector<1x512xf32>
    %11 = vector.broadcast %10 : vector<1x512xf32> to vector<8x512xf32>
    %12 = arith.addf %9, %11 : vector<8x512xf32>
    %cst_11 = arith.constant 0.000000e+00 : f32
    %13 = vector.broadcast %cst_11 : f32 to vector<8x512xf32>
    %14 = arith.maximumf %12, %13 : vector<8x512xf32>
    %c0_12 = arith.constant 0 : index
    %c0_13 = arith.constant 0 : index
    %15 = vector.load %arg6[%c0_12, %c0_13] : memref<8x512xf32, #tpu.memory_space<vmem>>, vector<8x512xf32>
    tpu.vector_store %arg6[%c0_12, %c0_13], %14 {strides = array<i32>} : memref<8x512xf32, #tpu.memory_space<vmem>>, vector<8x512xf32>,
    return
  }
  func.func @transform_0(%arg0: i32) -> (i32, i32) {
    %c0_i32 = arith.constant 0 : i32
    %c0_i32_0 = arith.constant 0 : i32
    return %arg0, %c0_i32 : i32, i32
  }
  func.func @transform_1(%arg0: i32) -> (i32, i32) {
    %c0_i32 = arith.constant 0 : i32
    %c0_i32_0 = arith.constant 0 : i32
    %c0_i32_1 = arith.constant 0 : i32
    return %c0_i32, %c0_i32_0 : i32, i32
  }
  func.func @transform_2(%arg0: i32) -> (i32, i32) {
    %c0_i32 = arith.constant 0 : i32
    %c0_i32_0 = arith.constant 0 : i32
    %c0_i32_1 = arith.constant 0 : i32
    return %c0_i32, %c0_i32_0 : i32, i32
  }
  func.func @transform_3(%arg0: i32) -> (i32, i32) {
    %c0_i32 = arith.constant 0 : i32
    %c0_i32_0 = arith.constant 0 : i32
    %c0_i32_1 = arith.constant 0 : i32
    return %c0_i32, %c0_i32_0 : i32, i32
  }
  func.func @transform_4(%arg0: i32) -> (i32, i32) {
    %c0_i32 = arith.constant 0 : i32
    %c0_i32_0 = arith.constant 0 : i32
    %c0_i32_1 = arith.constant 0 : i32
    return %c0_i32, %c0_i32_0 : i32, i32
  }
  func.func @transform_5(%arg0: i32) -> (i32, i32) {
    %c0_i32 = arith.constant 0 : i32
    %c0_i32_0 = arith.constant 0 : i32
    return %arg0, %c0_i32 : i32, i32
  }
}

</mosaic_0001>

<llo_original>
// kernel: tpu_custom_call.1
$region0: #{tpu_custom_call.1}
  #allocation0 [shape = 'u32[]', space=smem, size = 0x4, offset = 0x4, fixed_abs, tag = 'smem constant byte address 0x4 - core index']
  #allocation1 [shape = 'u32[144,128]{1,0:T(1,128)}', space=vmem, size = 0x12000, scoped, tag = 'internal scratch']
  %s0 = inlined_call_operand.hbm [shape: f32[8,40], index: 0, kind: input, shape index: {}]
  %s1 = inlined_call_operand.hbm [shape: f32[40,128], index: 1, kind: input, shape index: {}]
  %s2 = inlined_call_operand.vmem [shape: f32[1,128], index: 2, kind: input, shape index: {}]
  %s3 = inlined_call_operand.hbm [shape: f32[128,512], index: 3, kind: input, shape index: {}]
  %s4 = inlined_call_operand.vmem [shape: f32[1,512], index: 4, kind: input, shape index: {}]
  %s5 = inlined_call_operand.hbm [shape: f32[8,512], index: 5, kind: output, shape index: {}]
  %s6 = sld [smem:[#allocation0]]
  $region42: #{tpu_custom_call.1} parent=0
    _
  %s8 = ssub.s32 1, %s6
  %s9 = scalar_select 0, %s8, %s6
  $region1: #{tpu_custom_call.1} parent=0
    #allocation2 [shape = 'u8[4096]{0}', space=vmem, size = 0x1000, scoped, tag = 'input window, operand 0, single buffered']
    #allocation3 [shape = 's32[1]{0}', space=sflag, size = 0x4, scoped, tag = 'scoped memory for tpu_custom_call.1']
    #allocation4 [shape = 's32[1]{0}', space=sflag, size = 0x4, scoped, tag = 'scoped memory for tpu_custom_call.1']
    #allocation5 [shape = 'u8[20480]{0}', space=vmem, size = 0x5000, scoped, tag = 'input window, operand 1, single buffered']
    #allocation6 [shape = 's32[1]{0}', space=sflag, size = 0x4, scoped, tag = 'scoped memory for tpu_custom_call.1']
    #allocation7 [shape = 'u8[262144]{0}', space=vmem, size = 0x40000, scoped, tag = 'input window, operand 3, single buffered']
    #allocation8 [shape = 'u8[16384]{0}', space=vmem, size = 0x4000, scoped, tag = 'output window, operand 0, single buffered']
    %10 = vsyncpa [#allocation3], 0
    %11 = vsyncpa [#allocation6], 0
    %12 = vsyncpa [#allocation4], 0
    // Predicated region
    $region2: #{tpu_custom_call.1} parent=1 // pred_check
      _
    $region3: #{tpu_custom_call.1} parent=1 // pred_check_branch
      %14 = sbr.rel (0) target = $region5
    $region4: #{tpu_custom_call.1} parent=1 // pred_region
      %s16 = ssub.s32 128, 128
      %17 = vsyncadd [#allocation3], %s16
      %s19 = sshll.u32 [#allocation2], 4
      %s20 = int_to_ptr.vmem [resolvable:$true] %s19
      %22 = dma.hbm_to_vmem [thread:$0]  %s0, 128, %s20, [#allocation3]
    $region5: #{tpu_custom_call.1} parent=1 // pred_fallthru
      _
    // Predicated region
    $region6: #{tpu_custom_call.1} parent=1 // pred_check
      _
    $region7: #{tpu_custom_call.1} parent=1 // pred_check_branch
      %24 = sbr.rel (0) target = $region9
    $region8: #{tpu_custom_call.1} parent=1 // pred_region
      %s26 = ssub.s32 640, 640
      %27 = vsyncadd [#allocation6], %s26
      %s28 = sshll.u32 [#allocation5], 4
      %s29 = int_to_ptr.vmem [resolvable:$true] %s28
      %34 = dma.hbm_to_vmem [thread:$0]  %s1, 640, %s29, [#allocation6], 128, 128, 8
    $region9: #{tpu_custom_call.1} parent=1 // pred_fallthru
      _
    // Predicated region
    $region10: #{tpu_custom_call.1} parent=1 // pred_check
      _
    $region11: #{tpu_custom_call.1} parent=1 // pred_check_branch
      %36 = sbr.rel (0) target = $region13
    $region12: #{tpu_custom_call.1} parent=1 // pred_region
      _
    $region13: #{tpu_custom_call.1} parent=1 // pred_fallthru
      _
    // Predicated region
    $region14: #{tpu_custom_call.1} parent=1 // pred_check
      _
    $region15: #{tpu_custom_call.1} parent=1 // pred_check_branch
      %38 = sbr.rel (0) target = $region17
    $region16: #{tpu_custom_call.1} parent=1 // pred_region
      %s40 = ssub.s32 8192, 8192
      %41 = vsyncadd [#allocation6], %s40
      %s42 = sshll.u32 [#allocation7], 4
      %s43 = int_to_ptr.vmem [resolvable:$true] %s42
      %48 = dma.hbm_to_vmem [thread:$0]  %s3, 8192, %s43, [#allocation6], 512, 512, 32
    $region17: #{tpu_custom_call.1} parent=1 // pred_fallthru
      _
    // Predicated region
    $region18: #{tpu_custom_call.1} parent=1 // pred_check
      _
    $region19: #{tpu_custom_call.1} parent=1 // pred_check_branch
      %50 = sbr.rel (0) target = $region21
    $region20: #{tpu_custom_call.1} parent=1 // pred_region
      _
    $region21: #{tpu_custom_call.1} parent=1 // pred_fallthru
      _
    // Predicated region
    $region22: #{tpu_custom_call.1} parent=1 // pred_check
      _
    $region23: #{tpu_custom_call.1} parent=1 // pred_check_branch
      %52 = sbr.rel (0) target = $region25
    $region24: #{tpu_custom_call.1} parent=1 // pred_region
      %53 = dma.done [#allocation3], 128
    $region25: #{tpu_custom_call.1} parent=1 // pred_fallthru
      _
    // Predicated region
    $region26: #{tpu_custom_call.1} parent=1 // pred_check
      _
    $region27: #{tpu_custom_call.1} parent=1 // pred_check_branch
      %55 = sbr.rel (0) target = $region29
    $region28: #{tpu_custom_call.1} parent=1 // pred_region
      %56 = dma.done [#allocation6], 640
    $region29: #{tpu_custom_call.1} parent=1 // pred_fallthru
      _
    // Predicated region
    $region30: #{tpu_custom_call.1} parent=1 // pred_check
      _
    $region31: #{tpu_custom_call.1} parent=1 // pred_check_branch
      %58 = sbr.rel (0) target = $region33
    $region32: #{tpu_custom_call.1} parent=1 // pred_region
      %59 = dma.done [#allocation6], 8192
    $region33: #{tpu_custom_call.1} parent=1 // pred_fallthru
      _
    %v60 = vld [vmem:[#allocation5] sm:$0xff]
    %v61 = vld [vmem:[#allocation5 + $0x8] sm:$0xff]
    %v62 = vld [vmem:[#allocation5 + $0x10] sm:$0xff]
    %v63 = vld [vmem:[#allocation5 + $0x18] sm:$0xff]
    %v64 = vld [vmem:[#allocation5 + $0x20] sm:$0xff]
    %v65 = vld [vmem:[#allocation7] sm:$0xff]
    %v66 = vld [vmem:[#allocation7 + $0x8] sm:$0xff]
    %v67 = vld [vmem:[#allocation7 + $0x10] sm:$0xff]
    %v68 = vld [vmem:[#allocation7 + $0x18] sm:$0xff]
    %v69 = vld [vmem:[#allocation7 + $0x20] sm:$0xff]
    %v70 = vld [vmem:[#allocation7 + $0x28] sm:$0xff]
    %v71 = vld [vmem:[#allocation7 + $0x30] sm:$0xff]
    %v72 = vld [vmem:[#allocation7 + $0x38] sm:$0xff]
    %v73 = vld [vmem:[#allocation7 + $0x40] sm:$0xff]
    %v74 = vld [vmem:[#allocation7 + $0x48] sm:$0xff]
    %v75 = vld [vmem:[#allocation7 + $0x50] sm:$0xff]
    %v76 = vld [vmem:[#allocation7 + $0x58] sm:$0xff]
    %v77 = vld [vmem:[#allocation7 + $0x60] sm:$0xff]
    %v78 = vld [vmem:[#allocation7 + $0x68] sm:$0xff]
    %v79 = vld [vmem:[#allocation7 + $0x70] sm:$0xff]
    %v80 = vld [vmem:[#allocation7 + $0x78] sm:$0xff]
    %v81 = vld [vmem:[#allocation7 + $0x80] sm:$0xff]
    %v82 = vld [vmem:[#allocation7 + $0x88] sm:$0xff]
    %v83 = vld [vmem:[#allocation7 + $0x90] sm:$0xff]
    %v84 = vld [vmem:[#allocation7 + $0x98] sm:$0xff]
    %v85 = vld [vmem:[#allocation7 + $0xa0] sm:$0xff]
    %v86 = vld [vmem:[#allocation7 + $0xa8] sm:$0xff]
    %v87 = vld [vmem:[#allocation7 + $0xb0] sm:$0xff]
    %v88 = vld [vmem:[#allocation7 + $0xb8] sm:$0xff]
    %v89 = vld [vmem:[#allocation7 + $0xc0] sm:$0xff]
    %v90 = vld [vmem:[#allocation7 + $0xc8] sm:$0xff]
    %v91 = vld [vmem:[#allocation7 + $0xd0] sm:$0xff]
    %v92 = vld [vmem:[#allocation7 + $0xd8] sm:$0xff]
    %v93 = vld [vmem:[#allocation7 + $0xe0] sm:$0xff]
    %v94 = vld [vmem:[#allocation7 + $0xe8] sm:$0xff]
    %v95 = vld [vmem:[#allocation7 + $0xf0] sm:$0xff]
    %v96 = vld [vmem:[#allocation7 + $0xf8] sm:$0xff]
    %v97 = vld [vmem:[#allocation7 + $0x100] sm:$0xff]
    %v98 = vld [vmem:[#allocation7 + $0x108] sm:$0xff]
    %v99 = vld [vmem:[#allocation7 + $0x110] sm:$0xff]
    %v100 = vld [vmem:[#allocation7 + $0x118] sm:$0xff]
    %v101 = vld [vmem:[#allocation7 + $0x120] sm:$0xff]
    %v102 = vld [vmem:[#allocation7 + $0x128] sm:$0xff]
    %v103 = vld [vmem:[#allocation7 + $0x130] sm:$0xff]
    %v104 = vld [vmem:[#allocation7 + $0x138] sm:$0xff]
    %v105 = vld [vmem:[#allocation7 + $0x140] sm:$0xff]
    %v106 = vld [vmem:[#allocation7 + $0x148] sm:$0xff]
    %v107 = vld [vmem:[#allocation7 + $0x150] sm:$0xff]
    %v108 = vld [vmem:[#allocation7 + $0x158] sm:$0xff]
    %v109 = vld [vmem:[#allocation7 + $0x160] sm:$0xff]
    %v110 = vld [vmem:[#allocation7 + $0x168] sm:$0xff]
    %v111 = vld [vmem:[#allocation7 + $0x170] sm:$0xff]
    %v112 = vld [vmem:[#allocation7 + $0x178] sm:$0xff]
    %v113 = vld [vmem:[#allocation7 + $0x180] sm:$0xff]
    %v114 = vld [vmem:[#allocation7 + $0x188] sm:$0xff]
    %v115 = vld [vmem:[#allocation7 + $0x190] sm:$0xff]
    %v116 = vld [vmem:[#allocation7 + $0x198] sm:$0xff]
    %v117 = vld [vmem:[#allocation7 + $0x1a0] sm:$0xff]
    %v118 = vld [vmem:[#allocation7 + $0x1a8] sm:$0xff]
    %v119 = vld [vmem:[#allocation7 + $0x1b0] sm:$0xff]
    %v120 = vld [vmem:[#allocation7 + $0x1b8] sm:$0xff]
    %v121 = vld [vmem:[#allocation7 + $0x1c0] sm:$0xff]
    %v122 = vld [vmem:[#allocation7 + $0x1c8] sm:$0xff]
    %v123 = vld [vmem:[#allocation7 + $0x1d0] sm:$0xff]
    %v124 = vld [vmem:[#allocation7 + $0x1d8] sm:$0xff]
    %v125 = vld [vmem:[#allocation7 + $0x1e0] sm:$0xff]
    %v126 = vld [vmem:[#allocation7 + $0x1e8] sm:$0xff]
    %v127 = vld [vmem:[#allocation7 + $0x1f0] sm:$0xff]
    %v128 = vld [vmem:[#allocation7 + $0x1f8] sm:$0xff]
    %v129 = vld [vmem:[#allocation2] sm:$0xff]
    %v130 = vld [vmem:[%s2] sm:$0x1]
    %v132 = vlaneseq
    %v133 = vshrl.u32 %v132, 7
    %v134 = vsub.s32 0, %v133
    %v135 = vrot.slane %v130, %v134
    %vm137 = vcmask 326656
    %v139 = vsel %vm137, %v129, 0
    %141 = vmatprep.subr.mxu0 0.0
    %142 = vmatpush1.msra.mxu0 %v60
    %143 = vmatprep.subr.mxu0 0.0
    %144 = vmatpush1.msra.mxu0 %v61
    %145 = vmatprep.subr.mxu0 0.0
    %146 = vmatpush1.msra.mxu0 %v62
    %147 = vmatprep.subr.mxu0 0.0
    %148 = vmatpush1.msra.mxu0 %v63
    %149 = vmatprep.subr.mxu0 0.0
    %150 = vmatpush1.msra.mxu0 %v64
    %151 = vmatprep.subr.mxu0 0.0
    %152 = vmatpush1.msra.mxu0 0.0
    %153 = vmatprep.subr.mxu0 0.0
    %154 = vmatpush1.msra.mxu0 0.0
    %155 = vmatprep.subr.mxu0 0.0
    %156 = vmatpush1.msra.mxu0 0.0
    %157 = vmatprep.subr.mxu0 0.0
    %158 = vmatpush1.msra.mxu0 0.0
    %159 = vmatprep.subr.mxu0 0.0
    %160 = vmatpush1.msra.mxu0 0.0
    %161 = vmatprep.subr.mxu0 0.0
    %162 = vmatpush1.msra.mxu0 0.0
    %163 = vmatprep.subr.mxu0 0.0
    %164 = vmatpush1.msra.mxu0 0.0
    %165 = vmatprep.subr.mxu0 0.0
    %166 = vmatpush1.msra.mxu0 0.0
    %167 = vmatprep.subr.mxu0 0.0
    %168 = vmatpush1.msra.mxu0 0.0
    %169 = vmatprep.subr.mxu0 0.0
    %170 = vmatpush1.msra.mxu0 0.0
    %171 = vmatprep.subr.mxu0 0.0
    %172 = vmatpush1.msra.mxu0 0.0
    %173 = vmatprep.subr.mxu0 0.0
    %174 = vmatpush1.msra.mxu0 0.0
    %175 = vmatprep.subr.mxu0 0.0
    %176 = vmatpush1.msra.mxu0 0.0
    %177 = vmatprep.subr.mxu0 0.0
    %178 = vmatpush1.msra.mxu0 0.0
    %179 = vmatprep.subr.mxu0 0.0
    %180 = vmatpush1.msra.mxu0 0.0
    %181 = vmatprep.subr.mxu0 0.0
    %182 = vmatpush1.msra.mxu0 0.0
    %183 = vmatprep.subr.mxu0 0.0
    %184 = vmatpush1.msra.mxu0 0.0
    %185 = vmatprep.subr.mxu0 0.0
    %186 = vmatpush1.msra.mxu0 0.0
    %187 = vmatprep.subr.mxu0 0.0
    %188 = vmatpush1.msra.mxu0 0.0
    %189 = vmatprep.subr.mxu0 0.0
    %190 = vmatpush1.msra.mxu0 0.0
    %191 = vmatprep.subr.mxu0 0.0
    %192 = vmatpush1.msra.mxu0 0.0
    %193 = vmatprep.subr.mxu0 0.0
    %194 = vmatpush1.msra.mxu0 0.0
    %195 = vmatprep.subr.mxu0 0.0
    %196 = vmatpush1.msra.mxu0 0.0
    %197 = vmatprep.subr.mxu0 0.0
    %198 = vmatpush1.msra.mxu0 0.0
    %199 = vmatprep.subr.mxu0 0.0
    %200 = vmatpush1.msra.mxu0 0.0
    %201 = vmatprep.subr.mxu0 0.0
    %202 = vmatpush1.msra.mxu0 0.0
    %203 = vmatprep.subr.mxu0 0.0
    %204 = vmatpush1.msra.mxu0 0.0
    %205 = vmatprep.mubr.f32.mxu0 0.0
    %206 = vmatmul.mubr.f32.gmra.mrb[0].mxu0 %v139
    %v207 = vpop.f32.mrb[0].mxu0
    %v208 = vadd.f32 %v135, %v207
    %v209 = vpop.f32.mrb[0].mxu0
    %210 = vdwg.mxu0
    %v211 = vmax.f32 %v208, 0.0
    %v212 = vld [vmem:[%s4] sm:$0xf]
    %v214 = vlaneseq
    %v215 = vshrl.u32 %v214, 7
    %v216 = vsub.s32 0, %v215
    %v217 = vrot.slane %v212, %v216
    %v218 = vlaneseq
    %v219 = vshrl.u32 %v218, 7
    %v220 = vsub.s32 1, %v219
    %v221 = vrot.slane %v212, %v220
    %v222 = vlaneseq
    %v223 = vshrl.u32 %v222, 7
    %v224 = vsub.s32 2, %v223
    %v225 = vrot.slane %v212, %v224
    %v226 = vlaneseq
    %v227 = vshrl.u32 %v226, 7
    %v228 = vsub.s32 3, %v227
    %v229 = vrot.slane %v212, %v228
    %234 = vmatprep.subr.mxu0 %v66
    %235 = vmatpush1.msra.mxu0 %v65
    %236 = vmatprep.subr.mxu0 %v70
    %237 = vmatpush1.msra.mxu0 %v69
    %238 = vmatprep.subr.mxu0 %v74
    %239 = vmatpush1.msra.mxu0 %v73
    %240 = vmatprep.subr.mxu0 %v78
    %241 = vmatpush1.msra.mxu0 %v77
    %242 = vmatprep.subr.mxu0 %v82
    %243 = vmatpush1.msra.mxu0 %v81
    %244 = vmatprep.subr.mxu0 %v86
    %245 = vmatpush1.msra.mxu0 %v85
    %246 = vmatprep.subr.mxu0 %v90
    %247 = vmatpush1.msra.mxu0 %v89
    %248 = vmatprep.subr.mxu0 %v94
    %249 = vmatpush1.msra.mxu0 %v93
    %250 = vmatprep.subr.mxu0 %v98
    %251 = vmatpush1.msra.mxu0 %v97
    %252 = vmatprep.subr.mxu0 %v102
    %253 = vmatpush1.msra.mxu0 %v101
    %254 = vmatprep.subr.mxu0 %v106
    %255 = vmatpush1.msra.mxu0 %v105
    %256 = vmatprep.subr.mxu0 %v110
    %257 = vmatpush1.msra.mxu0 %v109
    %258 = vmatprep.subr.mxu0 %v114
    %259 = vmatpush1.msra.mxu0 %v113
    %260 = vmatprep.subr.mxu0 %v118
    %261 = vmatpush1.msra.mxu0 %v117
    %262 = vmatprep.subr.mxu0 %v122
    %263 = vmatpush1.msra.mxu0 %v121
    %264 = vmatprep.subr.mxu0 %v126
    %265 = vmatpush1.msra.mxu0 %v125
    %266 = vmatprep.subr.mxu0 0.0
    %267 = vmatpush1.msra.mxu0 0.0
    %268 = vmatprep.subr.mxu0 0.0
    %269 = vmatpush1.msra.mxu0 0.0
    %270 = vmatprep.subr.mxu0 0.0
    %271 = vmatpush1.msra.mxu0 0.0
    %272 = vmatprep.subr.mxu0 0.0
    %273 = vmatpush1.msra.mxu0 0.0
    %274 = vmatprep.subr.mxu0 0.0
    %275 = vmatpush1.msra.mxu0 0.0
    %276 = vmatprep.subr.mxu0 0.0
    %277 = vmatpush1.msra.mxu0 0.0
    %278 = vmatprep.subr.mxu0 0.0
    %279 = vmatpush1.msra.mxu0 0.0
    %280 = vmatprep.subr.mxu0 0.0
    %281 = vmatpush1.msra.mxu0 0.0
    %282 = vmatprep.subr.mxu0 0.0
    %283 = vmatpush1.msra.mxu0 0.0
    %284 = vmatprep.subr.mxu0 0.0
    %285 = vmatpush1.msra.mxu0 0.0
    %286 = vmatprep.subr.mxu0 0.0
    %287 = vmatpush1.msra.mxu0 0.0
    %288 = vmatprep.subr.mxu0 0.0
    %289 = vmatpush1.msra.mxu0 0.0
    %290 = vmatprep.subr.mxu0 0.0
    %291 = vmatpush1.msra.mxu0 0.0
    %292 = vmatprep.subr.mxu0 0.0
    %293 = vmatpush1.msra.mxu0 0.0
    %294 = vmatprep.subr.mxu0 0.0
    %295 = vmatpush1.msra.mxu0 0.0
    %296 = vmatprep.subr.mxu0 0.0
    %297 = vmatpush1.msra.mxu0 0.0
    %298 = vmatprep.mubr.f32.mxu0 0.0
    %299 = vmatmul.mubr.f32.gmra.mrb[0].mxu0 %v211
    %v300 = vpop.f32.mrb[0].mxu0
    %v301 = vadd.f32 %v217, %v300
    %v302 = vpop.f32.mrb[0].mxu0
    %v303 = vadd.f32 %v221, %v302
    %304 = vdwg.mxu0
    %305 = vmatprep.subr.mxu0 %v68
    %306 = vmatpush1.msra.mxu0 %v67
    %307 = vmatprep.subr.mxu0 %v72
    %308 = vmatpush1.msra.mxu0 %v71
    %309 = vmatprep.subr.mxu0 %v76
    %310 = vmatpush1.msra.mxu0 %v75
    %311 = vmatprep.subr.mxu0 %v80
    %312 = vmatpush1.msra.mxu0 %v79
    %313 = vmatprep.subr.mxu0 %v84
    %314 = vmatpush1.msra.mxu0 %v83
    %315 = vmatprep.subr.mxu0 %v88
    %316 = vmatpush1.msra.mxu0 %v87
    %317 = vmatprep.subr.mxu0 %v92
    %318 = vmatpush1.msra.mxu0 %v91
    %319 = vmatprep.subr.mxu0 %v96
    %320 = vmatpush1.msra.mxu0 %v95
    %321 = vmatprep.subr.mxu0 %v100
    %322 = vmatpush1.msra.mxu0 %v99
    %323 = vmatprep.subr.mxu0 %v104
    %324 = vmatpush1.msra.mxu0 %v103
    %325 = vmatprep.subr.mxu0 %v108
    %326 = vmatpush1.msra.mxu0 %v107
    %327 = vmatprep.subr.mxu0 %v112
    %328 = vmatpush1.msra.mxu0 %v111
    %329 = vmatprep.subr.mxu0 %v116
    %330 = vmatpush1.msra.mxu0 %v115
    %331 = vmatprep.subr.mxu0 %v120
    %332 = vmatpush1.msra.mxu0 %v119
    %333 = vmatprep.subr.mxu0 %v124
    %334 = vmatpush1.msra.mxu0 %v123
    %335 = vmatprep.subr.mxu0 %v128
    %336 = vmatpush1.msra.mxu0 %v127
    %337 = vmatprep.subr.mxu0 0.0
    %338 = vmatpush1.msra.mxu0 0.0
    %339 = vmatprep.subr.mxu0 0.0
    %340 = vmatpush1.msra.mxu0 0.0
    %341 = vmatprep.subr.mxu0 0.0
    %342 = vmatpush1.msra.mxu0 0.0
    %343 = vmatprep.subr.mxu0 0.0
    %344 = vmatpush1.msra.mxu0 0.0
    %345 = vmatprep.subr.mxu0 0.0
    %346 = vmatpush1.msra.mxu0 0.0
    %347 = vmatprep.subr.mxu0 0.0
    %348 = vmatpush1.msra.mxu0 0.0
    %349 = vmatprep.subr.mxu0 0.0
    %350 = vmatpush1.msra.mxu0 0.0
    %351 = vmatprep.subr.mxu0 0.0
    %352 = vmatpush1.msra.mxu0 0.0
    %353 = vmatprep.subr.mxu0 0.0
    %354 = vmatpush1.msra.mxu0 0.0
    %355 = vmatprep.subr.mxu0 0.0
    %356 = vmatpush1.msra.mxu0 0.0
    %357 = vmatprep.subr.mxu0 0.0
    %358 = vmatpush1.msra.mxu0 0.0
    %359 = vmatprep.subr.mxu0 0.0
    %360 = vmatpush1.msra.mxu0 0.0
    %361 = vmatprep.subr.mxu0 0.0
    %362 = vmatpush1.msra.mxu0 0.0
    %363 = vmatprep.subr.mxu0 0.0
    %364 = vmatpush1.msra.mxu0 0.0
    %365 = vmatprep.subr.mxu0 0.0
    %366 = vmatpush1.msra.mxu0 0.0
    %367 = vmatprep.subr.mxu0 0.0
    %368 = vmatpush1.msra.mxu0 0.0
    %369 = vmatprep.mubr.f32.mxu0 0.0
    %370 = vmatmul.mubr.f32.gmra.mrb[0].mxu0 %v211
    %v371 = vpop.f32.mrb[0].mxu0
    %v372 = vadd.f32 %v225, %v371
    %v373 = vpop.f32.mrb[0].mxu0
    %v374 = vadd.f32 %v229, %v373
    %375 = vdwg.mxu0
    %v376 = vmax.f32 %v301, 0.0
    %v377 = vmax.f32 %v303, 0.0
    %v378 = vmax.f32 %v372, 0.0
    %v379 = vmax.f32 %v374, 0.0
    %380 = vst [vmem:[#allocation8] sm:$0xff] %v376
    %381 = vst [vmem:[#allocation8 + $0x8] sm:$0xff] %v377
    %382 = vst [vmem:[#allocation8 + $0x10] sm:$0xff] %v378
    %383 = vst [vmem:[#allocation8 + $0x18] sm:$0xff] %v379
    // Predicated region
    $region34: #{tpu_custom_call.1} parent=1 // pred_check
      _
    $region35: #{tpu_custom_call.1} parent=1 // pred_check_branch
      %385 = sbr.rel (0) target = $region37
    $region36: #{tpu_custom_call.1} parent=1 // pred_region
      %s387 = ssub.s32 512, 512
      %388 = vsyncadd [#allocation4], %s387
      %s390 = sshll.u32 [#allocation8], 4
      %s391 = int_to_ptr.vmem [resolvable:$true] %s390
      %393 = dma.vmem_to_hbm [thread:$0]  %s391, 512, %s5, [#allocation4]
    $region37: #{tpu_custom_call.1} parent=1 // pred_fallthru
      _
    // Predicated region
    $region38: #{tpu_custom_call.1} parent=1 // pred_check
      _
    $region39: #{tpu_custom_call.1} parent=1 // pred_check_branch
      %395 = sbr.rel (0) target = $region41
    $region40: #{tpu_custom_call.1} parent=1 // pred_region
      %396 = dma.done [#allocation4], 512
    $region41: #{tpu_custom_call.1} parent=1 // pred_fallthru
      _
    %397 = vsyncpa [#allocation3], 1
    %398 = vsyncpa [#allocation6], 1
    %399 = vsyncpa [#allocation4], 1

</llo_original>
